<compile_context>
chip_gen: v5e
topology: v5e:2x2
jax: 0.10.0
libtpu: 0.0.40
codegen_flags: <defaults>
</compile_context>

<pallas_src>
import math
import functools

import jax
import jax.numpy as jnp
from jax import lax
from jax.experimental import pallas as pl
from jax.experimental.pallas import tpu as pltpu


@functools.lru_cache(maxsize=None)
def _vmem_limit_bytes():
    """Generation-aware scoped-VMEM budget (~48 MiB v7x, ~96 MiB v5e/v6e)."""
    try:
        cap = getattr(pltpu.get_tpu_info(), "vmem_capacity_bytes", None)
    except Exception:
        cap = None
    if not cap:
        return 32 * 1024 * 1024  # conservative fallback, safe on every generation
    return int(min(cap * 3 // 4, 112 * 1024 * 1024))


def _pick_tile(n, candidates):
    """Largest candidate tile that divides n; falls back to the full dim."""
    for t in candidates:
        if n % t == 0:
            return t
    # TODO(synk): for large awkward n use a pl.cdiv grid + padded/masked tail
    # tile instead of one unpipelined full-size block.
    return n


# ----------------------------------------------------------------------------
# Kernel 1: fused q/k/v projections (bf16 MXU, scale folded into q output).
#   yq = ((xq @ Wq + bq) / sqrt(d_k)).astype(bf16)
#   yk = (xk @ Wk + bk).astype(bf16)
#   yv = (xv @ Wv + bv).astype(bf16)
# ----------------------------------------------------------------------------
def _qkv_proj_kernel(xq_ref, xk_ref, xv_ref,
                     wq_ref, wk_ref, wv_ref,
                     bq_ref, bk_ref, bv_ref,
                     yq_ref, yk_ref, yv_ref, *, q_scale):
    def proj(x_ref, w_ref, b_ref):
        y = jnp.dot(x_ref[...].astype(jnp.bfloat16), w_ref[...],
                    preferred_element_type=jnp.float32)
        return y + b_ref[...]

    yq_ref[...] = (proj(xq_ref, wq_ref, bq_ref) * q_scale).astype(yq_ref.dtype)
    yk_ref[...] = proj(xk_ref, wk_ref, bk_ref).astype(yk_ref.dtype)
    yv_ref[...] = proj(xv_ref, wv_ref, bv_ref).astype(yv_ref.dtype)


def qkv_projection(xq, xk, xv, wq, wk, wv, bq, bk, bv, *, q_scale):
    """x*: (M, D) f32; w*: (D, D) bf16; b*: (1, D) f32 -> three (M, D) bf16."""
    M, D = xq.shape
    tm = _pick_tile(M, (1024, 512, 256, 128))

    x_spec = pl.BlockSpec((tm, D), lambda i: (i, 0))
    w_spec = pl.BlockSpec((D, D), lambda i: (0, 0))
    b_spec = pl.BlockSpec((1, D), lambda i: (0, 0))
    y_spec = pl.BlockSpec((tm, D), lambda i: (i, 0))
    y_shape = jax.ShapeDtypeStruct((M, D), jnp.bfloat16)

    return pl.pallas_call(
        functools.partial(_qkv_proj_kernel, q_scale=q_scale),
        out_shape=(y_shape, y_shape, y_shape),
        grid=(M // tm,),
        in_specs=[x_spec, x_spec, x_spec,
                  w_spec, w_spec, w_spec,
                  b_spec, b_spec, b_spec],
        out_specs=(y_spec, y_spec, y_spec),
        compiler_params=pltpu.CompilerParams(
            dimension_semantics=("parallel",),
            vmem_limit_bytes=_vmem_limit_bytes()),
    )(xq, xk, xv, wq, wk, wv, bq, bk, bv)


# ----------------------------------------------------------------------------
# Kernel 2: attention fused with the output projection.
#   For one (batch, query-tile): per head h
#     s      = qh @ kh^T            (q is already pre-scaled by 1/sqrt(d_k))
#     e      = exp(s - max(s))      (f32 statistics)
#     num    = e @ vh               (bf16 MXU, f32 accumulation)
#     out_h  = num * 1/sum(e)       (EUP reciprocal on the small tensor)
#     acc   += out_h @ Wo[h*d_k:(h+1)*d_k, :]
#   o = acc + bo                    (single lane-dense (TQ, d_model) store)
# ----------------------------------------------------------------------------
def _attn_out_kernel(q_ref, k_ref, v_ref, wo_ref, bo_ref, o_ref, *, heads):
    tq, d_model = o_ref.shape[1], o_ref.shape[2]
    d_k = d_model // heads

    acc = jnp.zeros((tq, d_model), jnp.float32)
    for h in range(heads):                      # static unroll (small head counts)
        lo = h * d_k
        qh = q_ref[0, :, lo:lo + d_k]           # (TQ, d_k) bf16, pre-scaled
        kh = k_ref[0, :, lo:lo + d_k]           # (S,  d_k) bf16
        vh = v_ref[0, :, lo:lo + d_k]           # (S,  d_k) bf16

        # q @ k^T contracting the last axes directly (no materialized k.T).
        s = lax.dot_general(qh, kh, (((1,), (1,)), ((), ())),
                            preferred_element_type=jnp.float32)      # (TQ, S) f32
        s = s - jnp.max(s, axis=-1, keepdims=True)                   # stable softmax
        e = jnp.exp(s)
        denom = jnp.sum(e, axis=-1, keepdims=True)

        num = jnp.dot(e.astype(jnp.bfloat16), vh,
                      preferred_element_type=jnp.float32)            # (TQ, d_k)
        out_h = num * pl.reciprocal(denom, approx=True)              # normalize small tensor

        acc = acc + jnp.dot(out_h.astype(jnp.bfloat16), wo_ref[lo:lo + d_k, :],
                            preferred_element_type=jnp.float32)      # (TQ, d_model)

    o_ref[0] = (acc + bo_ref[...]).astype(o_ref.dtype)               # lane-dense store


def attention_output(q, k, v, wo, bo, *, heads):
    """q/k/v: (B, S, D) bf16 (q pre-scaled); wo: (D, D) bf16; bo: (1, D) f32."""
    B, S, D = q.shape
    tq = _pick_tile(S, (512, 256, 128))

    return pl.pallas_call(
        functools.partial(_attn_out_kernel, heads=heads),
        out_shape=jax.ShapeDtypeStruct((B, S, D), jnp.float32),
        grid=(B, S // tq),
        in_specs=[
            pl.BlockSpec((1, tq, D), lambda b, i: (b, i, 0)),
            pl.BlockSpec((1, S, D), lambda b, i: (b, 0, 0)),   # constant over i: no re-DMA
            pl.BlockSpec((1, S, D), lambda b, i: (b, 0, 0)),
            pl.BlockSpec((D, D), lambda b, i: (0, 0)),
            pl.BlockSpec((1, D), lambda b, i: (0, 0)),
        ],
        out_specs=pl.BlockSpec((1, tq, D), lambda b, i: (b, i, 0)),
        compiler_params=pltpu.CompilerParams(
            dimension_semantics=("parallel", "parallel"),
            vmem_limit_bytes=_vmem_limit_bytes()),
    )(q, k, v, wo, bo)


# ----------------------------------------------------------------------------
# Full MultiHeadAttention forward (glue in plain JAX — reshapes/dtype casts of
# the small weight tensors only, no activation stacks or transposes).
# ----------------------------------------------------------------------------
def multi_head_attention(q, k, v, params, heads):
    B, S, D = q.shape
    M = B * S
    d_k = D // heads

    wq = params["wq"].astype(jnp.bfloat16)
    wk = params["wk"].astype(jnp.bfloat16)
    wv = params["wv"].astype(jnp.bfloat16)
    wo = params["wo"].astype(jnp.bfloat16)
    bq = params["bq"].reshape(1, D)
    bk = params["bk"].reshape(1, D)
    bv = params["bv"].reshape(1, D)
    bo = params["bo"].reshape(1, D)

    yq, yk, yv = qkv_projection(
        q.reshape(M, D), k.reshape(M, D), v.reshape(M, D),
        wq, wk, wv, bq, bk, bv, q_scale=1.0 / math.sqrt(d_k))

    out = attention_output(
        yq.reshape(B, S, D), yk.reshape(B, S, D), yv.reshape(B, S, D),
        wo, bo, heads=heads)
    return out


# ----------------------------------------------------------------------------
# Pure-JAX f32 reference (for correctness check)
# ----------------------------------------------------------------------------
def multi_head_attention_ref(q, k, v, params, heads):
    B, S, D = q.shape
    d_k = D // heads

    def proj(x, w, b):
        return (x @ w + b).reshape(B, S, heads, d_k).transpose(0, 2, 1, 3)

    qh = proj(q, params["wq"], params["bq"])
    kh = proj(k, params["wk"], params["bk"])
    vh = proj(v, params["wv"], params["bv"])
    s = jnp.einsum("bhqd,bhkd->bhqk", qh, kh) / math.sqrt(d_k)
    p = jax.nn.softmax(s, axis=-1)
    o = jnp.einsum("bhqk,bhkd->bhqd", p, vh)
    concat = o.transpose(0, 2, 1, 3).reshape(B, S, D)
    return concat @ params["wo"] + params["bo"]


if __name__ == "__main__":
    B, S, D, H = 2, 8, 32, 4   # batch, seq, d_model, heads

    key = jax.random.PRNGKey(0)
    ks = jax.random.split(key, 11)
    w_scale = 1.0 / math.sqrt(D)

    params = {
        "wq": jax.random.normal(ks[0], (D, D), jnp.float32) * w_scale,
        "bq": jax.random.normal(ks[1], (D,), jnp.float32) * w_scale,
        "wk": jax.random.normal(ks[2], (D, D), jnp.float32) * w_scale,
        "bk": jax.random.normal(ks[3], (D,), jnp.float32) * w_scale,
        "wv": jax.random.normal(ks[4], (D, D), jnp.float32) * w_scale,
        "bv": jax.random.normal(ks[5], (D,), jnp.float32) * w_scale,
        "wo": jax.random.normal(ks[6], (D, D), jnp.float32) * w_scale,
        "bo": jax.random.normal(ks[7], (D,), jnp.float32) * w_scale,
    }

    q = jax.random.normal(ks[8], (B, S, D), jnp.float32)
    k = jax.random.normal(ks[9], (B, S, D), jnp.float32)
    v = jax.random.normal(ks[10], (B, S, D), jnp.float32)

    out = multi_head_attention(q, k, v, params, H)
    out = jax.block_until_ready(out)

    ref = multi_head_attention_ref(q, k, v, params, H)
    assert out.shape == (B, S, D)
    err = float(jnp.max(jnp.abs(out - ref)))
    # Tolerance accounts for bf16 MXU operands (three chained matmul stages)
    # and pl.reciprocal(approx=True) in the softmax denominator.
    assert jnp.allclose(out, ref, atol=5e-2, rtol=5e-2), \
        f"mismatch vs. reference, max|err|={err}"

    print("KERNEL_OK")
</pallas_src>

<mosaic_0001>
module attributes {stable_mosaic.version = 11 : i64} {
  func.func @_qkv_proj_kernel(%arg0: i32, %arg1: memref<16x32xf32, #tpu.memory_space<vmem>>, %arg2: memref<16x32xf32, #tpu.memory_space<vmem>>, %arg3: memref<16x32xf32, #tpu.memory_space<vmem>>, %arg4: memref<32x32xbf16, #tpu.memory_space<vmem>>, %arg5: memref<32x32xbf16, #tpu.memory_space<vmem>>, %arg6: memref<32x32xbf16, #tpu.memory_space<vmem>>, %arg7: memref<1x32xf32, #tpu.memory_space<vmem>>, %arg8: memref<1x32xf32, #tpu.memory_space<vmem>>, %arg9: memref<1x32xf32, #tpu.memory_space<vmem>>, %arg10: memref<16x32xbf16, #tpu.memory_space<vmem>>, %arg11: memref<16x32xbf16, #tpu.memory_space<vmem>>, %arg12: memref<16x32xbf16, #tpu.memory_space<vmem>>) attributes {dimension_semantics = [#tpu.dimension_semantics<parallel>], iteration_bounds = array<i64: 1>, scalar_prefetch = 0 : i64, scratch_operands = 0 : i64, tpu.core_type = #tpu.core_type<tc>, window_params = [{transform_indices = @transform_0, window_bounds = array<i64: 16, 32>}, {transform_indices = @transform_1, window_bounds = array<i64: 16, 32>}, {transform_indices = @transform_2, window_bounds = array<i64: 16, 32>}, {pipeline_mode = #tpu.pipeline_mode<synchronous>, transform_indices = @transform_3, window_bounds = array<i64: 32, 32>}, {pipeline_mode = #tpu.pipeline_mode<synchronous>, transform_indices = @transform_4, window_bounds = array<i64: 32, 32>}, {pipeline_mode = #tpu.pipeline_mode<synchronous>, transform_indices = @transform_5, window_bounds = array<i64: 32, 32>}, {pipeline_mode = #tpu.pipeline_mode<synchronous>, transform_indices = @transform_6, window_bounds = array<i64: 1, 32>}, {pipeline_mode = #tpu.pipeline_mode<synchronous>, transform_indices = @transform_7, window_bounds = array<i64: 1, 32>}, {pipeline_mode = #tpu.pipeline_mode<synchronous>, transform_indices = @transform_8, window_bounds = array<i64: 1, 32>}, {transform_indices = @transform_9, window_bounds = array<i64: 16, 32>}, {transform_indices = @transform_10, window_bounds = array<i64: 16, 32>}, {transform_indices = @transform_11, window_bounds = array<i64: 16, 32>}]} {
    %c0 = arith.constant 0 : index
    %c0_0 = arith.constant 0 : index
    %0 = vector.load %arg1[%c0, %c0_0] : memref<16x32xf32, #tpu.memory_space<vmem>>, vector<16x32xf32>
    %1 = arith.truncf %0 : vector<16x32xf32> to vector<16x32xbf16>
    %c0_1 = arith.constant 0 : index
    %c0_2 = arith.constant 0 : index
    %2 = vector.load %arg4[%c0_1, %c0_2] : memref<32x32xbf16, #tpu.memory_space<vmem>>, vector<32x32xbf16>
    %cst = arith.constant dense<0.000000e+00> : vector<16x32xf32>
    %3 = tpu.matmul %1, %2, %cst {dimension_numbers = #tpu.dot_dimension_numbers<[1], [0], [0], [1], [0, 0, 1, 1], [], []>} : vector<16x32xbf16>, vector<32x32xbf16>, vector<16x32xf32> -> vector<16x32xf32>
    %c0_3 = arith.constant 0 : index
    %c0_4 = arith.constant 0 : index
    %4 = vector.load %arg7[%c0_3, %c0_4] : memref<1x32xf32, #tpu.memory_space<vmem>>, vector<1x32xf32>
    %5 = vector.broadcast %4 : vector<1x32xf32> to vector<16x32xf32>
    %6 = arith.addf %3, %5 : vector<16x32xf32>
    %cst_5 = arith.constant 0.353553385 : f32
    %7 = vector.broadcast %cst_5 : f32 to vector<16x32xf32>
    %8 = arith.mulf %6, %7 : vector<16x32xf32>
    %9 = arith.truncf %8 : vector<16x32xf32> to vector<16x32xbf16>
    %c0_6 = arith.constant 0 : index
    %c0_7 = arith.constant 0 : index
    %10 = vector.load %arg10[%c0_6, %c0_7] : memref<16x32xbf16, #tpu.memory_space<vmem>>, vector<16x32xbf16>
    tpu.vector_store %arg10[%c0_6, %c0_7], %9 {strides = array<i32>} : memref<16x32xbf16, #tpu.memory_space<vmem>>, vector<16x32xbf16>,
    %c0_8 = arith.constant 0 : index
    %c0_9 = arith.constant 0 : index
    %11 = vector.load %arg2[%c0_8, %c0_9] : memref<16x32xf32, #tpu.memory_space<vmem>>, vector<16x32xf32>
    %12 = arith.truncf %11 : vector<16x32xf32> to vector<16x32xbf16>
    %c0_10 = arith.constant 0 : index
    %c0_11 = arith.constant 0 : index
    %13 = vector.load %arg5[%c0_10, %c0_11] : memref<32x32xbf16, #tpu.memory_space<vmem>>, vector<32x32xbf16>
    %cst_12 = arith.constant dense<0.000000e+00> : vector<16x32xf32>
    %14 = tpu.matmul %12, %13, %cst_12 {dimension_numbers = #tpu.dot_dimension_numbers<[1], [0], [0], [1], [0, 0, 1, 1], [], []>} : vector<16x32xbf16>, vector<32x32xbf16>, vector<16x32xf32> -> vector<16x32xf32>
    %c0_13 = arith.constant 0 : index
    %c0_14 = arith.constant 0 : index
    %15 = vector.load %arg8[%c0_13, %c0_14] : memref<1x32xf32, #tpu.memory_space<vmem>>, vector<1x32xf32>
    %16 = vector.broadcast %15 : vector<1x32xf32> to vector<16x32xf32>
    %17 = arith.addf %14, %16 : vector<16x32xf32>
    %18 = arith.truncf %17 : vector<16x32xf32> to vector<16x32xbf16>
    %c0_15 = arith.constant 0 : index
    %c0_16 = arith.constant 0 : index
    %19 = vector.load %arg11[%c0_15, %c0_16] : memref<16x32xbf16, #tpu.memory_space<vmem>>, vector<16x32xbf16>
    tpu.vector_store %arg11[%c0_15, %c0_16], %18 {strides = array<i32>} : memref<16x32xbf16, #tpu.memory_space<vmem>>, vector<16x32xbf16>,
    %c0_17 = arith.constant 0 : index
    %c0_18 = arith.constant 0 : index
    %20 = vector.load %arg3[%c0_17, %c0_18] : memref<16x32xf32, #tpu.memory_space<vmem>>, vector<16x32xf32>
    %21 = arith.truncf %20 : vector<16x32xf32> to vector<16x32xbf16>
    %c0_19 = arith.constant 0 : index
    %c0_20 = arith.constant 0 : index
    %22 = vector.load %arg6[%c0_19, %c0_20] : memref<32x32xbf16, #tpu.memory_space<vmem>>, vector<32x32xbf16>
    %cst_21 = arith.constant dense<0.000000e+00> : vector<16x32xf32>
    %23 = tpu.matmul %21, %22, %cst_21 {dimension_numbers = #tpu.dot_dimension_numbers<[1], [0], [0], [1], [0, 0, 1, 1], [], []>} : vector<16x32xbf16>, vector<32x32xbf16>, vector<16x32xf32> -> vector<16x32xf32>
    %c0_22 = arith.constant 0 : index
    %c0_23 = arith.constant 0 : index
    %24 = vector.load %arg9[%c0_22, %c0_23] : memref<1x32xf32, #tpu.memory_space<vmem>>, vector<1x32xf32>
    %25 = vector.broadcast %24 : vector<1x32xf32> to vector<16x32xf32>
    %26 = arith.addf %23, %25 : vector<16x32xf32>
    %27 = arith.truncf %26 : vector<16x32xf32> to vector<16x32xbf16>
    %c0_24 = arith.constant 0 : index
    %c0_25 = arith.constant 0 : index
    %28 = vector.load %arg12[%c0_24, %c0_25] : memref<16x32xbf16, #tpu.memory_space<vmem>>, vector<16x32xbf16>
    tpu.vector_store %arg12[%c0_24, %c0_25], %27 {strides = array<i32>} : memref<16x32xbf16, #tpu.memory_space<vmem>>, vector<16x32xbf16>,
    return
  }
  func.func @transform_0(%arg0: i32) -> (i32, i32) {
    %c0_i32 = arith.constant 0 : i32
    %c0_i32_0 = arith.constant 0 : i32
    return %arg0, %c0_i32 : i32, i32
  }
  func.func @transform_1(%arg0: i32) -> (i32, i32) {
    %c0_i32 = arith.constant 0 : i32
    %c0_i32_0 = arith.constant 0 : i32
    return %arg0, %c0_i32 : i32, i32
  }
  func.func @transform_2(%arg0: i32) -> (i32, i32) {
    %c0_i32 = arith.constant 0 : i32
    %c0_i32_0 = arith.constant 0 : i32
    return %arg0, %c0_i32 : i32, i32
  }
  func.func @transform_3(%arg0: i32) -> (i32, i32) {
    %c0_i32 = arith.constant 0 : i32
    %c0_i32_0 = arith.constant 0 : i32
    %c0_i32_1 = arith.constant 0 : i32
    return %c0_i32, %c0_i32_0 : i32, i32
  }
  func.func @transform_4(%arg0: i32) -> (i32, i32) {
    %c0_i32 = arith.constant 0 : i32
    %c0_i32_0 = arith.constant 0 : i32
    %c0_i32_1 = arith.constant 0 : i32
    return %c0_i32, %c0_i32_0 : i32, i32
  }
  func.func @transform_5(%arg0: i32) -> (i32, i32) {
    %c0_i32 = arith.constant 0 : i32
    %c0_i32_0 = arith.constant 0 : i32
    %c0_i32_1 = arith.constant 0 : i32
    return %c0_i32, %c0_i32_0 : i32, i32
  }
  func.func @transform_6(%arg0: i32) -> (i32, i32) {
    %c0_i32 = arith.constant 0 : i32
    %c0_i32_0 = arith.constant 0 : i32
    %c0_i32_1 = arith.constant 0 : i32
    return %c0_i32, %c0_i32_0 : i32, i32
  }
  func.func @transform_7(%arg0: i32) -> (i32, i32) {
    %c0_i32 = arith.constant 0 : i32
    %c0_i32_0 = arith.constant 0 : i32
    %c0_i32_1 = arith.constant 0 : i32
    return %c0_i32, %c0_i32_0 : i32, i32
  }
  func.func @transform_8(%arg0: i32) -> (i32, i32) {
    %c0_i32 = arith.constant 0 : i32
    %c0_i32_0 = arith.constant 0 : i32
    %c0_i32_1 = arith.constant 0 : i32
    return %c0_i32, %c0_i32_0 : i32, i32
  }
  func.func @transform_9(%arg0: i32) -> (i32, i32) {
    %c0_i32 = arith.constant 0 : i32
    %c0_i32_0 = arith.constant 0 : i32
    return %arg0, %c0_i32 : i32, i32
  }
  func.func @transform_10(%arg0: i32) -> (i32, i32) {
    %c0_i32 = arith.constant 0 : i32
    %c0_i32_0 = arith.constant 0 : i32
    return %arg0, %c0_i32 : i32, i32
  }
  func.func @transform_11(%arg0: i32) -> (i32, i32) {
    %c0_i32 = arith.constant 0 : i32
    %c0_i32_0 = arith.constant 0 : i32
    return %arg0, %c0_i32 : i32, i32
  }
}

</mosaic_0001>

<llo_original>
// kernel: tpu_custom_call.1
$region0: #{tpu_custom_call.1}
  #allocation0 [shape = 'u32[]', space=smem, size = 0x4, offset = 0x4, fixed_abs, tag = 'smem constant byte address 0x4 - core index']
  #allocation1 [shape = 'u32[72,128]{1,0:T(1,128)}', space=vmem, size = 0x9000, scoped, tag = 'internal scratch']
  %s0 = inlined_call_operand.hbm [shape: f32[16,32], index: 0, kind: input, shape index: {}]
  %s1 = inlined_call_operand.hbm [shape: f32[16,32], index: 1, kind: input, shape index: {}]
  %s2 = inlined_call_operand.hbm [shape: f32[16,32], index: 2, kind: input, shape index: {}]
  %s3 = inlined_call_operand.hbm [shape: bf16[32,32], index: 3, kind: input, shape index: {}]
  %s4 = inlined_call_operand.hbm [shape: bf16[32,32], index: 4, kind: input, shape index: {}]
  %s5 = inlined_call_operand.hbm [shape: bf16[32,32], index: 5, kind: input, shape index: {}]
  %s6 = inlined_call_operand.vmem [shape: f32[1,32], index: 6, kind: input, shape index: {}]
  %s7 = inlined_call_operand.vmem [shape: f32[1,32], index: 7, kind: input, shape index: {}]
  %s8 = inlined_call_operand.vmem [shape: f32[1,32], index: 8, kind: input, shape index: {}]
  %s9 = inlined_call_operand.hbm [shape: bf16[16,32], index: 9, kind: output, shape index: {0}]
  %s10 = inlined_call_operand.hbm [shape: bf16[16,32], index: 10, kind: output, shape index: {1}]
  %s11 = inlined_call_operand.hbm [shape: bf16[16,32], index: 11, kind: output, shape index: {2}]
  %12 = xla_tuple %s9, %s10, %s11
  %s13 = sld [smem:[#allocation0]]
  $region86: #{tpu_custom_call.1} parent=0
    _
  %s15 = ssub.s32 1, %s13
  %s16 = scalar_select 0, %s15, %s13
  $region1: #{tpu_custom_call.1} parent=0
    #allocation2 [shape = 'u8[8192]{0}', space=vmem, size = 0x2000, scoped, tag = 'input window, operand 0, single buffered']
    #allocation3 [shape = 's32[1]{0}', space=sflag, size = 0x4, scoped, tag = 'scoped memory for tpu_custom_call.1']
    #allocation4 [shape = 's32[1]{0}', space=sflag, size = 0x4, scoped, tag = 'scoped memory for tpu_custom_call.1']
    #allocation5 [shape = 'u8[8192]{0}', space=vmem, size = 0x2000, scoped, tag = 'input window, operand 1, single buffered']
    #allocation6 [shape = 's32[1]{0}', space=sflag, size = 0x4, scoped, tag = 'scoped memory for tpu_custom_call.1']
    #allocation7 [shape = 'u8[8192]{0}', space=vmem, size = 0x2000, scoped, tag = 'input window, operand 2, single buffered']
    #allocation8 [shape = 'u8[8192]{0}', space=vmem, size = 0x2000, scoped, tag = 'input window, operand 3, single buffered']
    #allocation9 [shape = 's32[1]{0}', space=sflag, size = 0x4, scoped, tag = 'scoped memory for tpu_custom_call.1']
    #allocation10 [shape = 'u8[8192]{0}', space=vmem, size = 0x2000, scoped, tag = 'input window, operand 4, single buffered']
    #allocation11 [shape = 'u8[8192]{0}', space=vmem, size = 0x2000, scoped, tag = 'input window, operand 5, single buffered']
    #allocation12 [shape = 's32[1]{0}', space=sflag, size = 0x4, scoped, tag = 'scoped memory for tpu_custom_call.1']
    #allocation13 [shape = 'u8[4096]{0}', space=vmem, size = 0x1000, scoped, tag = 'output window, operand 0, single buffered']
    #allocation14 [shape = 'u8[4096]{0}', space=vmem, size = 0x1000, scoped, tag = 'output window, operand 1, single buffered']
    #allocation15 [shape = 's32[1]{0}', space=sflag, size = 0x4, scoped, tag = 'scoped memory for tpu_custom_call.1']
    #allocation16 [shape = 'u8[4096]{0}', space=vmem, size = 0x1000, scoped, tag = 'output window, operand 2, single buffered']
    %17 = vsyncpa [#allocation3], 0
    %18 = vsyncpa [#allocation6], 0
    %19 = vsyncpa [#allocation9], 0
    %20 = vsyncpa [#allocation12], 0
    %21 = vsyncpa [#allocation4], 0
    %22 = vsyncpa [#allocation15], 0
    // Predicated region
    $region2: #{tpu_custom_call.1} parent=1 // pred_check
      _
    $region3: #{tpu_custom_call.1} parent=1 // pred_check_branch
      %24 = sbr.rel (0) target = $region5
    $region4: #{tpu_custom_call.1} parent=1 // pred_region
      %26 = vsyncadd [#allocation3], 0
      %s27 = sshll.u32 %s0, 4
      %s28 = int_to_ptr.hbm [resolvable:$true] %s27
      %s29 = sshll.u32 [#allocation2], 4
      %s30 = int_to_ptr.vmem [resolvable:$true] %s29
      %35 = dma.hbm_to_vmem [thread:$0]  %s28, 256, %s30, [#allocation3], 128, 128, 8
    $region5: #{tpu_custom_call.1} parent=1 // pred_fallthru
      _
    // Predicated region
    $region6: #{tpu_custom_call.1} parent=1 // pred_check
      _
    $region7: #{tpu_custom_call.1} parent=1 // pred_check_branch
      %37 = sbr.rel (0) target = $region9
    $region8: #{tpu_custom_call.1} parent=1 // pred_region
      %39 = vsyncadd [#allocation6], 0
      %s40 = sshll.u32 %s1, 4
      %s41 = int_to_ptr.hbm [resolvable:$true] %s40
      %s42 = sshll.u32 [#allocation5], 4
      %s43 = int_to_ptr.vmem [resolvable:$true] %s42
      %48 = dma.hbm_to_vmem [thread:$0]  %s41, 256, %s43, [#allocation6], 128, 128, 8
    $region9: #{tpu_custom_call.1} parent=1 // pred_fallthru
      _
    // Predicated region
    $region10: #{tpu_custom_call.1} parent=1 // pred_check
      _
    $region11: #{tpu_custom_call.1} parent=1 // pred_check_branch
      %50 = sbr.rel (0) target = $region13
    $region12: #{tpu_custom_call.1} parent=1 // pred_region
      %52 = vsyncadd [#allocation6], 0
      %s53 = sshll.u32 %s2, 4
      %s54 = int_to_ptr.hbm [resolvable:$true] %s53
      %s55 = sshll.u32 [#allocation7], 4
      %s56 = int_to_ptr.vmem [resolvable:$true] %s55
      %61 = dma.hbm_to_vmem [thread:$0]  %s54, 256, %s56, [#allocation6], 128, 128, 8
    $region13: #{tpu_custom_call.1} parent=1 // pred_fallthru
      _
    // Predicated region
    $region14: #{tpu_custom_call.1} parent=1 // pred_check
      _
    $region15: #{tpu_custom_call.1} parent=1 // pred_check_branch
      %63 = sbr.rel (0) target = $region17
    $region16: #{tpu_custom_call.1} parent=1 // pred_region
      %65 = vsyncadd [#allocation9], 0
      %s66 = sshll.u32 %s3, 4
      %s67 = int_to_ptr.hbm [resolvable:$true] %s66
      %s68 = sshll.u32 [#allocation8], 4
      %s69 = int_to_ptr.vmem [resolvable:$true] %s68
      %74 = dma.hbm_to_vmem [thread:$0]  %s67, 256, %s69, [#allocation9], 64, 64, 4
    $region17: #{tpu_custom_call.1} parent=1 // pred_fallthru
      _
    // Predicated region
    $region18: #{tpu_custom_call.1} parent=1 // pred_check
      _
    $region19: #{tpu_custom_call.1} parent=1 // pred_check_branch
      %76 = sbr.rel (0) target = $region21
    $region20: #{tpu_custom_call.1} parent=1 // pred_region
      %78 = vsyncadd [#allocation9], 0
      %s79 = sshll.u32 %s4, 4
      %s80 = int_to_ptr.hbm [resolvable:$true] %s79
      %s81 = sshll.u32 [#allocation10], 4
      %s82 = int_to_ptr.vmem [resolvable:$true] %s81
      %87 = dma.hbm_to_vmem [thread:$0]  %s80, 256, %s82, [#allocation9], 64, 64, 4
    $region21: #{tpu_custom_call.1} parent=1 // pred_fallthru
      _
    // Predicated region
    $region22: #{tpu_custom_call.1} parent=1 // pred_check
      _
    $region23: #{tpu_custom_call.1} parent=1 // pred_check_branch
      %89 = sbr.rel (0) target = $region25
    $region24: #{tpu_custom_call.1} parent=1 // pred_region
      %91 = vsyncadd [#allocation12], 0
      %s92 = sshll.u32 %s5, 4
      %s93 = int_to_ptr.hbm [resolvable:$true] %s92
      %s94 = sshll.u32 [#allocation11], 4
      %s95 = int_to_ptr.vmem [resolvable:$true] %s94
      %100 = dma.hbm_to_vmem [thread:$0]  %s93, 256, %s95, [#allocation12], 64, 64, 4
    $region25: #{tpu_custom_call.1} parent=1 // pred_fallthru
      _
    // Predicated region
    $region26: #{tpu_custom_call.1} parent=1 // pred_check
      _
    $region27: #{tpu_custom_call.1} parent=1 // pred_check_branch
      %102 = sbr.rel (0) target = $region29
    $region28: #{tpu_custom_call.1} parent=1 // pred_region
      _
    $region29: #{tpu_custom_call.1} parent=1 // pred_fallthru
      _
    // Predicated region
    $region30: #{tpu_custom_call.1} parent=1 // pred_check
      _
    $region31: #{tpu_custom_call.1} parent=1 // pred_check_branch
      %104 = sbr.rel (0) target = $region33
    $region32: #{tpu_custom_call.1} parent=1 // pred_region
      _
    $region33: #{tpu_custom_call.1} parent=1 // pred_fallthru
      _
    // Predicated region
    $region34: #{tpu_custom_call.1} parent=1 // pred_check
      _
    $region35: #{tpu_custom_call.1} parent=1 // pred_check_branch
      %106 = sbr.rel (0) target = $region37
    $region36: #{tpu_custom_call.1} parent=1 // pred_region
      _
    $region37: #{tpu_custom_call.1} parent=1 // pred_fallthru
      _
    // Predicated region
    $region38: #{tpu_custom_call.1} parent=1 // pred_check
      _
    $region39: #{tpu_custom_call.1} parent=1 // pred_check_branch
      %108 = sbr.rel (0) target = $region41
    $region40: #{tpu_custom_call.1} parent=1 // pred_region
      %110 = dma.done [#allocation3], 256
    $region41: #{tpu_custom_call.1} parent=1 // pred_fallthru
      _
    // Predicated region
    $region42: #{tpu_custom_call.1} parent=1 // pred_check
      _
    $region43: #{tpu_custom_call.1} parent=1 // pred_check_branch
      %112 = sbr.rel (0) target = $region45
    $region44: #{tpu_custom_call.1} parent=1 // pred_region
      %114 = dma.done [#allocation6], 256
    $region45: #{tpu_custom_call.1} parent=1 // pred_fallthru
      _
    // Predicated region
    $region46: #{tpu_custom_call.1} parent=1 // pred_check
      _
    $region47: #{tpu_custom_call.1} parent=1 // pred_check_branch
      %116 = sbr.rel (0) target = $region49
    $region48: #{tpu_custom_call.1} parent=1 // pred_region
      %118 = dma.done [#allocation6], 256
    $region49: #{tpu_custom_call.1} parent=1 // pred_fallthru
      _
    // Predicated region
    $region50: #{tpu_custom_call.1} parent=1 // pred_check
      _
    $region51: #{tpu_custom_call.1} parent=1 // pred_check_branch
      %120 = sbr.rel (0) target = $region53
    $region52: #{tpu_custom_call.1} parent=1 // pred_region
      %122 = dma.done [#allocation9], 256
    $region53: #{tpu_custom_call.1} parent=1 // pred_fallthru
      _
    // Predicated region
    $region54: #{tpu_custom_call.1} parent=1 // pred_check
      _
    $region55: #{tpu_custom_call.1} parent=1 // pred_check_branch
      %124 = sbr.rel (0) target = $region57
    $region56: #{tpu_custom_call.1} parent=1 // pred_region
      %126 = dma.done [#allocation9], 256
    $region57: #{tpu_custom_call.1} parent=1 // pred_fallthru
      _
    // Predicated region
    $region58: #{tpu_custom_call.1} parent=1 // pred_check
      _
    $region59: #{tpu_custom_call.1} parent=1 // pred_check_branch
      %128 = sbr.rel (0) target = $region61
    $region60: #{tpu_custom_call.1} parent=1 // pred_region
      %130 = dma.done [#allocation12], 256
    $region61: #{tpu_custom_call.1} parent=1 // pred_fallthru
      _
    %v132 = vld [vmem:[#allocation2] sm:$0xff]
    %v133 = vld [vmem:[#allocation2 + $0x8] sm:$0xff]
    %v134 = vpack.c.bf16 %v133, %v132
    %v135 = vld [vmem:[#allocation8] sm:$0xf]
    %v136 = vld [vmem:[#allocation8 + $0x4] sm:$0xf]
    %v137 = vld [vmem:[#allocation8 + $0x8] sm:$0xf]
    %v138 = vld [vmem:[#allocation8 + $0xc] sm:$0xf]
    %v139 = vld [vmem:[%s6] sm:$0x1]
    %v141 = vperm.slane %v139, 0
    %v147 = vunpack.c.l.b16 %v135
    %v148 = vunpack.c.l.b16 %v136
    %v149 = vunpack.c.l.b16 %v137
    %v150 = vunpack.c.l.b16 %v138
    %v151 = vpack.c.b16 %v148, %v147
    %v152 = vpack.c.b16 %v150, %v149
    %vm155 = vcmask 261120
    %v157 = vsel %vm155, %v134, 0
    %159 = vmatpush.bf16.msra.mxu0 0
    %160 = vmatpush.bf16.msra.mxu0 0
    %161 = vmatpush.bf16.msra.mxu0 0
    %162 = vmatpush.bf16.msra.mxu0 0
    %163 = vmatpush.bf16.msra.mxu0 0
    %164 = vmatpush.bf16.msra.mxu0 0
    %165 = vmatpush.bf16.msra.mxu0 %v152
    %166 = vmatpush.bf16.msra.mxu0 %v151
    %167 = vmatmul.bf16.gmra.mxu0 %v157
    %v168 = vpop.f32.mrf.mxu0
    %v169 = vadd.f32 %v141, %v168
    %v170 = vpop.f32.mrf.mxu0
    %v171 = vadd.f32 %v141, %v170
    %172 = vdwg.mxu0
    %v173 = vmul.f32 %v169, 0.35355338
    %v174 = vmul.f32 %v171, 0.35355338
    %v175 = vpack.c.bf16 %v173, %v173
    %v176 = vpack.c.bf16 %v174, %v174
    %vm177 = vcmask 257024
    %178 = vst.msk [vmem:[#allocation13] sm:$0xf] %vm177, %v175
    %179 = vst.msk [vmem:[#allocation13 + $0x4] sm:$0xf] %vm177, %v176
    %v180 = vld [vmem:[#allocation5] sm:$0xff]
    %v181 = vld [vmem:[#allocation5 + $0x8] sm:$0xff]
    %v182 = vpack.c.bf16 %v181, %v180
    %v183 = vld [vmem:[#allocation10] sm:$0xf]
    %v184 = vld [vmem:[#allocation10 + $0x4] sm:$0xf]
    %v185 = vld [vmem:[#allocation10 + $0x8] sm:$0xf]
    %v186 = vld [vmem:[#allocation10 + $0xc] sm:$0xf]
    %v187 = vld [vmem:[%s7] sm:$0x1]
    %v189 = vperm.slane %v187, 0
    %v195 = vunpack.c.l.b16 %v183
    %v196 = vunpack.c.l.b16 %v184
    %v197 = vunpack.c.l.b16 %v185
    %v198 = vunpack.c.l.b16 %v186
    %v199 = vpack.c.b16 %v196, %v195
    %v200 = vpack.c.b16 %v198, %v197
    %v204 = vsel %vm155, %v182, 0
    %206 = vmatpush.bf16.msra.mxu0 0
    %207 = vmatpush.bf16.msra.mxu0 0
    %208 = vmatpush.bf16.msra.mxu0 0
    %209 = vmatpush.bf16.msra.mxu0 0
    %210 = vmatpush.bf16.msra.mxu0 0
    %211 = vmatpush.bf16.msra.mxu0 0
    %212 = vmatpush.bf16.msra.mxu0 %v200
    %213 = vmatpush.bf16.msra.mxu0 %v199
    %214 = vmatmul.bf16.gmra.mxu0 %v204
    %v215 = vpop.f32.mrf.mxu0
    %v216 = vadd.f32 %v189, %v215
    %v217 = vpop.f32.mrf.mxu0
    %v218 = vadd.f32 %v189, %v217
    %219 = vdwg.mxu0
    %v220 = vpack.c.bf16 %v216, %v216
    %v221 = vpack.c.bf16 %v218, %v218
    %222 = vst.msk [vmem:[#allocation14] sm:$0xf] %vm177, %v220
    %223 = vst.msk [vmem:[#allocation14 + $0x4] sm:$0xf] %vm177, %v221
    %v224 = vld [vmem:[#allocation7] sm:$0xff]
    %v225 = vld [vmem:[#allocation7 + $0x8] sm:$0xff]
    %v226 = vpack.c.bf16 %v225, %v224
    %v227 = vld [vmem:[#allocation11] sm:$0xf]
    %v228 = vld [vmem:[#allocation11 + $0x4] sm:$0xf]
    %v229 = vld [vmem:[#allocation11 + $0x8] sm:$0xf]
    %v230 = vld [vmem:[#allocation11 + $0xc] sm:$0xf]
    %v231 = vld [vmem:[%s8] sm:$0x1]
    %v233 = vperm.slane %v231, 0
    %v239 = vunpack.c.l.b16 %v227
    %v240 = vunpack.c.l.b16 %v228
    %v241 = vunpack.c.l.b16 %v229
    %v242 = vunpack.c.l.b16 %v230
    %v243 = vpack.c.b16 %v240, %v239
    %v244 = vpack.c.b16 %v242, %v241
    %v248 = vsel %vm155, %v226, 0
    %250 = vmatpush.bf16.msra.mxu0 0
    %251 = vmatpush.bf16.msra.mxu0 0
    %252 = vmatpush.bf16.msra.mxu0 0
    %253 = vmatpush.bf16.msra.mxu0 0
    %254 = vmatpush.bf16.msra.mxu0 0
    %255 = vmatpush.bf16.msra.mxu0 0
    %256 = vmatpush.bf16.msra.mxu0 %v244
    %257 = vmatpush.bf16.msra.mxu0 %v243
    %258 = vmatmul.bf16.gmra.mxu0 %v248
    %v259 = vpop.f32.mrf.mxu0
    %v260 = vadd.f32 %v233, %v259
    %v261 = vpop.f32.mrf.mxu0
    %v262 = vadd.f32 %v233, %v261
    %263 = vdwg.mxu0
    %v264 = vpack.c.bf16 %v260, %v260
    %v265 = vpack.c.bf16 %v262, %v262
    %266 = vst.msk [vmem:[#allocation16] sm:$0xf] %vm177, %v264
    %267 = vst.msk [vmem:[#allocation16 + $0x4] sm:$0xf] %vm177, %v265
    // Predicated region
    $region62: #{tpu_custom_call.1} parent=1 // pred_check
      _
    $region63: #{tpu_custom_call.1} parent=1 // pred_check_branch
      %269 = sbr.rel (0) target = $region65
    $region64: #{tpu_custom_call.1} parent=1 // pred_region
      %271 = vsyncadd [#allocation4], 0
      %s272 = sshll.u32 [#allocation13], 4
      %s273 = int_to_ptr.vmem [resolvable:$true] %s272
      %s274 = sshll.u32 %s9, 4
      %s275 = int_to_ptr.hbm [resolvable:$true] %s274
      %280 = dma.vmem_to_hbm [thread:$0]  %s273, 128, %s275, [#allocation4], 64, 64, 4
    $region65: #{tpu_custom_call.1} parent=1 // pred_fallthru
      _
    // Predicated region
    $region66: #{tpu_custom_call.1} parent=1 // pred_check
      _
    $region67: #{tpu_custom_call.1} parent=1 // pred_check_branch
      %282 = sbr.rel (0) target = $region69
    $region68: #{tpu_custom_call.1} parent=1 // pred_region
      %284 = vsyncadd [#allocation15], 0
      %s285 = sshll.u32 [#allocation14], 4
      %s286 = int_to_ptr.vmem [resolvable:$true] %s285
      %s287 = sshll.u32 %s10, 4
      %s288 = int_to_ptr.hbm [resolvable:$true] %s287
      %293 = dma.vmem_to_hbm [thread:$0]  %s286, 128, %s288, [#allocation15], 64, 64, 4
    $region69: #{tpu_custom_call.1} parent=1 // pred_fallthru
      _
    // Predicated region
    $region70: #{tpu_custom_call.1} parent=1 // pred_check
      _
    $region71: #{tpu_custom_call.1} parent=1 // pred_check_branch
      %295 = sbr.rel (0) target = $region73
    $region72: #{tpu_custom_call.1} parent=1 // pred_region
      %297 = vsyncadd [#allocation15], 0
      %s298 = sshll.u32 [#allocation16], 4
      %s299 = int_to_ptr.vmem [resolvable:$true] %s298
      %s300 = sshll.u32 %s11, 4
      %s301 = int_to_ptr.hbm [resolvable:$true] %s300
      %306 = dma.vmem_to_hbm [thread:$0]  %s299, 128, %s301, [#allocation15], 64, 64, 4
    $region73: #{tpu_custom_call.1} parent=1 // pred_fallthru
      _
    // Predicated region
    $region74: #{tpu_custom_call.1} parent=1 // pred_check
      _
    $region75: #{tpu_custom_call.1} parent=1 // pred_check_branch
      %308 = sbr.rel (0) target = $region77
    $region76: #{tpu_custom_call.1} parent=1 // pred_region
      %310 = dma.done [#allocation4], 128
    $region77: #{tpu_custom_call.1} parent=1 // pred_fallthru
      _
    // Predicated region
    $region78: #{tpu_custom_call.1} parent=1 // pred_check
      _
    $region79: #{tpu_custom_call.1} parent=1 // pred_check_branch
      %312 = sbr.rel (0) target = $region81
    $region80: #{tpu_custom_call.1} parent=1 // pred_region
      %314 = dma.done [#allocation15], 128
    $region81: #{tpu_custom_call.1} parent=1 // pred_fallthru
      _
    // Predicated region
    $region82: #{tpu_custom_call.1} parent=1 // pred_check
      _
    $region83: #{tpu_custom_call.1} parent=1 // pred_check_branch
      %316 = sbr.rel (0) target = $region85
    $region84: #{tpu_custom_call.1} parent=1 // pred_region
      %318 = dma.done [#allocation15], 128
    $region85: #{tpu_custom_call.1} parent=1 // pred_fallthru
      _
    %319 = vsyncpa [#allocation3], 1
    %320 = vsyncpa [#allocation6], 1
    %321 = vsyncpa [#allocation9], 1
    %322 = vsyncpa [#allocation12], 1
    %323 = vsyncpa [#allocation4], 1
    %324 = vsyncpa [#allocation15], 1

</llo_original>
